<compile_context>
chip_gen: v7x
topology: tpu7x:2x2x1
jax: 0.10.0
libtpu: 0.0.40
codegen_flags: <defaults>
</compile_context>

<pallas_src>
import math

import jax
import jax.numpy as jnp
from jax.experimental import pallas as pl
from jax.experimental.pallas import tpu as pltpu

# TODO(synk): pretrained ViTModel / BertModel backbones are not reproduced in
# Pallas; the kernel consumes their pooler_output features directly.

LN_EPS = 1e-5                      # PyTorch nn.LayerNorm default
_SQRT_HALF = 1.0 / math.sqrt(2.0)


def _gelu(x):
    # PyTorch nn.GELU() default = exact erf formulation.
    return 0.5 * x * (1.0 + jax.lax.erf(x * _SQRT_HALF))


def _project(x, w, ln_pack):
    """Linear -> LayerNorm -> GELU.  ln_pack rows: [linear bias, gamma, beta]."""
    b, gamma, beta = ln_pack[0], ln_pack[1], ln_pack[2]
    y = jnp.dot(x, w, preferred_element_type=jnp.float32) + b
    # single-pass LN statistics: var = E[y^2] - mean^2
    mu = jnp.mean(y, axis=-1, keepdims=True)
    ms = jnp.mean(y * y, axis=-1, keepdims=True)
    var = ms - mu * mu
    y = (y - mu) * jax.lax.rsqrt(var + LN_EPS) * gamma + beta
    return _gelu(y)


def _classify(fused, wc1, bc1, wc2, bc2):
    h = _gelu(jnp.dot(fused.astype(wc1.dtype), wc1,
                      preferred_element_type=jnp.float32) + bc1)
    # Dropout(0.1) is identity at inference time.
    return jnp.dot(h.astype(wc2.dtype), wc2,
                   preferred_element_type=jnp.float32) + bc2


def _multimodal_kernel(img_ref, txt_ref,
                       wi_ref, lni_ref, wt_ref, lnt_ref,
                       gate_w_ref, gate_b_ref,
                       wc1_ref, bc1_ref, wc2_ref, bc2_ref,
                       logits_ref, fused_ref):
    img_p = _project(img_ref[...], wi_ref[...], lni_ref[...])
    txt_p = _project(txt_ref[...], wt_ref[...], lnt_ref[...])

    # fusion_attention Linear(2F -> 2) + Softmax(dim=1), folded exactly:
    #   softmax([a0, a1])[0] == sigmoid(a0 - a1)
    # gate_w holds the pre-folded column differences as lane-dense (2, F) f32
    # rows, so the skinny (F, 1) MXU matmuls become a VPU mul + XLU reduce,
    # and the gate stays f32 even when streaming in bf16.
    gw = gate_w_ref[...]                                        # (2, F) f32
    d = (jnp.sum(img_p * gw[0], axis=-1, keepdims=True)
         + jnp.sum(txt_p * gw[1], axis=-1, keepdims=True)
         + gate_b_ref[0, 0])
    w_img = jax.nn.sigmoid(d)                                   # (TB, 1)
    fused = w_img * img_p + (1.0 - w_img) * txt_p

    fused_ref[...] = fused.astype(fused_ref.dtype)
    logits_ref[...] = _classify(fused, wc1_ref[...], bc1_ref[...],
                                wc2_ref[...], bc2_ref[...])


def _image_only_kernel(img_ref,
                       wi_ref, lni_ref,
                       wc1_ref, bc1_ref, wc2_ref, bc2_ref,
                       logits_ref, fused_ref):
    fused = _project(img_ref[...], wi_ref[...], lni_ref[...])
    fused_ref[...] = fused.astype(fused_ref.dtype)
    logits_ref[...] = _classify(fused, wc1_ref[...], bc1_ref[...],
                                wc2_ref[...], bc2_ref[...])


def _round_up(x, m):
    return (x + m - 1) // m * m


def _cdiv(a, b):
    return -(-a // b)


def _pick_batch_tile(B, block_b, mult):
    """Batch tile: multiple of `mult`, <= B (or == B for tiny batches)."""
    block_b = max(_round_up(block_b, mult), mult)
    if B > block_b:
        return block_b
    if B >= 2 * mult:
        # >=2 grid steps so ("parallel",) can shard across v7x's two TCs.
        return _round_up(_cdiv(B, 2), mult)
    # tiny batch: single block whose sublane dim equals the full batch dim
    # (allowed by the (8,128) rule; avoids host-side padding entirely).
    return B


def _vmem_limit_bytes(act_tile_bytes, weight_bytes):
    # act tiles are double-buffered by the pipeline; weights are single-buffered.
    need = 2 * act_tile_bytes + weight_bytes + (8 << 20)
    try:
        cap = int(pltpu.get_tpu_info().vmem_capacity_bytes)
    except Exception:                                  # pragma: no cover
        cap = 64 << 20                                 # assume v7x (smallest VMEM)
    budget = min(max(cap - (16 << 20), 32 << 20), 100 << 20)
    return int(min(max(need, 32 << 20), budget))


def multimodal_xray_head(img_features, params, text_features=None, *,
                         block_b=512, use_bf16=False):
    """Pallas implementation of MultimodalXrayModel.forward (post-encoder)."""
    B = img_features.shape[0]
    F = params["img_w"].shape[1]
    C = params["cls2_w"].shape[1]

    mult = 16 if use_bf16 else 8                # bf16 packs 2 rows per sublane
    TB = _pick_batch_tile(B, block_b, mult)
    grid = (_cdiv(B, TB),)

    C_pad = _round_up(C, 128)                   # lane-dense logits stores
    cdt = jnp.bfloat16 if use_bf16 else jnp.float32
    feat_dtype = cdt                            # features are the largest output

    img_in = img_features.astype(cdt)

    # pack LayerNorm params (linear bias, gamma, beta) -> one (3, F) array
    def ln_pack(prefix):
        return jnp.concatenate(
            [params[prefix + "_b"], params[prefix + "_g"], params[prefix + "_beta"]],
            axis=0).astype(jnp.float32)

    cls2_w, cls2_b = params["cls2_w"], params["cls2_b"]
    if C_pad != C:
        cls2_w = jnp.pad(cls2_w, ((0, 0), (0, C_pad - C)))
        cls2_b = jnp.pad(cls2_b, ((0, 0), (0, C_pad - C)))

    def wdt(w):                                  # matmul operands may stream bf16
        return w.astype(cdt)

    batch_spec = lambda d: pl.BlockSpec((TB, d), lambda i: (i, 0))
    vmem_res = pl.BlockSpec(memory_space=pltpu.MemorySpace.VMEM)   # single-buffered
    smem_res = pl.BlockSpec(memory_space=pltpu.MemorySpace.SMEM)   # scalar

    out_shape = (jax.ShapeDtypeStruct((B, C_pad), jnp.float32),
                 jax.ShapeDtypeStruct((B, F), feat_dtype))
    out_specs = (batch_spec(C_pad), batch_spec(F))

    if text_features is not None:
        txt_in = text_features.astype(cdt)
        # fold the 2-way softmax into sigmoid(logit difference); lane-dense f32.
        gate_w = jnp.stack(
            [params["att_w_img"][:, 0] - params["att_w_img"][:, 1],
             params["att_w_txt"][:, 0] - params["att_w_txt"][:, 1]],
            axis=0).astype(jnp.float32)                                # (2, F)
        gate_b = (params["att_b"][:, 0:1] - params["att_b"][:, 1:2]
                  ).astype(jnp.float32)                                # (1, 1)
        weights = (wdt(params["img_w"]), ln_pack("img"),
                   wdt(params["txt_w"]), ln_pack("txt"),
                   gate_w, gate_b,
                   wdt(params["cls1_w"]), params["cls1_b"].astype(jnp.float32),
                   wdt(cls2_w), cls2_b.astype(jnp.float32))
        args = (img_in, txt_in) + weights
        in_specs = ([batch_spec(img_in.shape[1]), batch_spec(txt_in.shape[1])]
                    + [vmem_res, vmem_res, vmem_res, vmem_res,
                       vmem_res, smem_res,
                       vmem_res, vmem_res, vmem_res, vmem_res])
        kernel = _multimodal_kernel
        in_row_bytes = (img_in.shape[1] + txt_in.shape[1]) * jnp.dtype(cdt).itemsize
    else:
        weights = (wdt(params["img_w"]), ln_pack("img"),
                   wdt(params["cls1_w"]), params["cls1_b"].astype(jnp.float32),
                   wdt(cls2_w), cls2_b.astype(jnp.float32))
        args = (img_in,) + weights
        in_specs = [batch_spec(img_in.shape[1])] + [vmem_res] * len(weights)
        kernel = _image_only_kernel
        in_row_bytes = img_in.shape[1] * jnp.dtype(cdt).itemsize

    out_row_bytes = C_pad * 4 + F * jnp.dtype(feat_dtype).itemsize
    act_tile_bytes = TB * (in_row_bytes + out_row_bytes)
    weight_bytes = sum(int(w.size) * w.dtype.itemsize for w in weights)

    logits, fused = pl.pallas_call(
        kernel,
        out_shape=out_shape,
        grid=grid,
        in_specs=in_specs,
        out_specs=out_specs,
        compiler_params=pltpu.CompilerParams(
            dimension_semantics=("parallel",),        # batch tiles; v7x dual-TC
            vmem_limit_bytes=_vmem_limit_bytes(act_tile_bytes, weight_bytes)),
    )(*args)

    return {"logits": logits[:, :C], "features": fused}


def init_params(key, img_dim, text_dim, fusion_dim, num_classes):
    """Deterministic synthetic parameters (weights stored [in, out])."""
    ks = jax.random.split(key, 6)
    s = 0.02
    return {
        "img_w": jax.random.normal(ks[0], (img_dim, fusion_dim), jnp.float32) * s,
        "img_b": jnp.zeros((1, fusion_dim), jnp.float32),
        "img_g": jnp.ones((1, fusion_dim), jnp.float32),
        "img_beta": jnp.zeros((1, fusion_dim), jnp.float32),
        "txt_w": jax.random.normal(ks[1], (text_dim, fusion_dim), jnp.float32) * s,
        "txt_b": jnp.zeros((1, fusion_dim), jnp.float32),
        "txt_g": jnp.ones((1, fusion_dim), jnp.float32),
        "txt_beta": jnp.zeros((1, fusion_dim), jnp.float32),
        # fusion_attention Linear(2*fusion_dim, 2), split into img / text halves.
        "att_w_img": jax.random.normal(ks[2], (fusion_dim, 2), jnp.float32) * s,
        "att_w_txt": jax.random.normal(ks[3], (fusion_dim, 2), jnp.float32) * s,
        "att_b": jnp.zeros((1, 2), jnp.float32),
        "cls1_w": jax.random.normal(ks[4], (fusion_dim, fusion_dim), jnp.float32) * s,
        "cls1_b": jnp.zeros((1, fusion_dim), jnp.float32),
        "cls2_w": jax.random.normal(ks[5], (fusion_dim, num_classes), jnp.float32) * s,
        "cls2_b": jnp.zeros((1, num_classes), jnp.float32),
    }


# ------------------------- pure-JAX references ------------------------------
def _ref_proj(x, w, b, g, beta):
    y = x @ w + b
    mu = jnp.mean(y, -1, keepdims=True)
    var = jnp.mean((y - mu) ** 2, -1, keepdims=True)
    y = (y - mu) / jnp.sqrt(var + LN_EPS) * g + beta
    return jax.nn.gelu(y, approximate=False)


def _reference(img, txt, p):
    img_p = _ref_proj(img, p["img_w"], p["img_b"], p["img_g"], p["img_beta"])
    txt_p = _ref_proj(txt, p["txt_w"], p["txt_b"], p["txt_g"], p["txt_beta"])
    att = jax.nn.softmax(img_p @ p["att_w_img"] + txt_p @ p["att_w_txt"] + p["att_b"],
                         axis=1)
    fused = att[:, 0:1] * img_p + att[:, 1:2] * txt_p
    h = jax.nn.gelu(fused @ p["cls1_w"] + p["cls1_b"], approximate=False)
    logits = h @ p["cls2_w"] + p["cls2_b"]
    return logits, fused


def _reference_image_only(img, p):
    fused = _ref_proj(img, p["img_w"], p["img_b"], p["img_g"], p["img_beta"])
    h = jax.nn.gelu(fused @ p["cls1_w"] + p["cls1_b"], approximate=False)
    logits = h @ p["cls2_w"] + p["cls2_b"]
    return logits, fused


if __name__ == "__main__":
    B, IMG_DIM, TXT_DIM, FUSION_DIM, NUM_CLASSES = 2, 32, 32, 32, 14

    key = jax.random.PRNGKey(0)
    k_img, k_txt, k_param = jax.random.split(key, 3)
    img_features = jax.random.normal(k_img, (B, IMG_DIM), jnp.float32)
    text_features = jax.random.normal(k_txt, (B, TXT_DIM), jnp.float32)
    params = init_params(k_param, IMG_DIM, TXT_DIM, FUSION_DIM, NUM_CLASSES)

    # multimodal path (f32)
    out = multimodal_xray_head(img_features, params, text_features)
    jax.block_until_ready(out)
    ref_logits, ref_fused = _reference(img_features, text_features, params)
    assert jnp.allclose(out["logits"], ref_logits, atol=1e-5, rtol=1e-5)
    assert jnp.allclose(out["features"], ref_fused, atol=1e-5, rtol=1e-5)

    # image-only path (text_inputs=None branch)
    out_img = multimodal_xray_head(img_features, params, None)
    jax.block_until_ready(out_img)
    ref_io_logits, ref_io_fused = _reference_image_only(img_features, params)
    assert jnp.allclose(out_img["logits"], ref_io_logits, atol=1e-5, rtol=1e-5)
    assert jnp.allclose(out_img["features"], ref_io_fused, atol=1e-5, rtol=1e-5)

    # multi-tile grid with a partial (masked) last block: B % TB != 0
    B2 = 10
    img2 = jax.random.normal(jax.random.PRNGKey(1), (B2, IMG_DIM), jnp.float32)
    txt2 = jax.random.normal(jax.random.PRNGKey(2), (B2, TXT_DIM), jnp.float32)
    out2 = multimodal_xray_head(img2, params, txt2, block_b=8)
    jax.block_until_ready(out2)
    ref2_logits, ref2_fused = _reference(img2, txt2, params)
    assert jnp.allclose(out2["logits"], ref2_logits, atol=1e-5, rtol=1e-5)
    assert jnp.allclose(out2["features"], ref2_fused, atol=1e-5, rtol=1e-5)

    # bf16 streaming path (f32 gate / accumulation; looser tolerance)
    out_bf16 = multimodal_xray_head(img_features, params, text_features, use_bf16=True)
    jax.block_until_ready(out_bf16)
    assert jnp.allclose(out_bf16["logits"], ref_logits, atol=5e-2, rtol=5e-2)
    assert jnp.allclose(out_bf16["features"].astype(jnp.float32), ref_fused,
                        atol=5e-2, rtol=5e-2)

    print("KERNEL_OK")
</pallas_src>

<mosaic_0001>
module attributes {stable_mosaic.version = 11 : i64} {
  func.func @_multimodal_kernel(%arg0: i32, %arg1: memref<2x32xf32, #tpu.memory_space<vmem>>, %arg2: memref<2x32xf32, #tpu.memory_space<vmem>>, %arg3: memref<32x32xf32, #tpu.memory_space<vmem>>, %arg4: memref<3x32xf32, #tpu.memory_space<vmem>>, %arg5: memref<32x32xf32, #tpu.memory_space<vmem>>, %arg6: memref<3x32xf32, #tpu.memory_space<vmem>>, %arg7: memref<2x32xf32, #tpu.memory_space<vmem>>, %arg8: memref<1x1xf32, #tpu.memory_space<smem>>, %arg9: memref<32x32xf32, #tpu.memory_space<vmem>>, %arg10: memref<1x32xf32, #tpu.memory_space<vmem>>, %arg11: memref<32x128xf32, #tpu.memory_space<vmem>>, %arg12: memref<1x128xf32, #tpu.memory_space<vmem>>, %arg13: memref<2x128xf32, #tpu.memory_space<vmem>>, %arg14: memref<2x32xf32, #tpu.memory_space<vmem>>) attributes {dimension_semantics = [#tpu.dimension_semantics<parallel>], iteration_bounds = array<i64: 1>, scalar_prefetch = 0 : i64, scratch_operands = 0 : i64, tpu.core_type = #tpu.core_type<tc>, window_params = [{transform_indices = @transform_0, window_bounds = array<i64: 2, 32>}, {transform_indices = @transform_1, window_bounds = array<i64: 2, 32>}, {pipeline_mode = #tpu.pipeline_mode<synchronous>, transform_indices = @transform_2, window_bounds = array<i64: 32, 32>}, {pipeline_mode = #tpu.pipeline_mode<synchronous>, transform_indices = @transform_3, window_bounds = array<i64: 3, 32>}, {pipeline_mode = #tpu.pipeline_mode<synchronous>, transform_indices = @transform_4, window_bounds = array<i64: 32, 32>}, {pipeline_mode = #tpu.pipeline_mode<synchronous>, transform_indices = @transform_5, window_bounds = array<i64: 3, 32>}, {pipeline_mode = #tpu.pipeline_mode<synchronous>, transform_indices = @transform_6, window_bounds = array<i64: 2, 32>}, {transform_indices = @transform_7, window_bounds = array<i64: 1, 1>}, {pipeline_mode = #tpu.pipeline_mode<synchronous>, transform_indices = @transform_8, window_bounds = array<i64: 32, 32>}, {pipeline_mode = #tpu.pipeline_mode<synchronous>, transform_indices = @transform_9, window_bounds = array<i64: 1, 32>}, {pipeline_mode = #tpu.pipeline_mode<synchronous>, transform_indices = @transform_10, window_bounds = array<i64: 32, 128>}, {pipeline_mode = #tpu.pipeline_mode<synchronous>, transform_indices = @transform_11, window_bounds = array<i64: 1, 128>}, {transform_indices = @transform_12, window_bounds = array<i64: 2, 128>}, {transform_indices = @transform_13, window_bounds = array<i64: 2, 32>}]} {
    %c0 = arith.constant 0 : index
    %c0_0 = arith.constant 0 : index
    %0 = vector.load %arg1[%c0, %c0_0] : memref<2x32xf32, #tpu.memory_space<vmem>>, vector<2x32xf32>
    %c0_1 = arith.constant 0 : index
    %c0_2 = arith.constant 0 : index
    %1 = vector.load %arg3[%c0_1, %c0_2] : memref<32x32xf32, #tpu.memory_space<vmem>>, vector<32x32xf32>
    %c0_3 = arith.constant 0 : index
    %c0_4 = arith.constant 0 : index
    %2 = vector.load %arg4[%c0_3, %c0_4] : memref<3x32xf32, #tpu.memory_space<vmem>>, vector<3x32xf32>
    %3 = vector.extract_strided_slice %2 {offsets = [0, 0], sizes = [1, 32], strides = [1, 1]} : vector<3x32xf32> to vector<1x32xf32>
    %4 = vector.shape_cast %3 : vector<1x32xf32> to vector<32xf32>
    %5 = vector.extract_strided_slice %2 {offsets = [1, 0], sizes = [1, 32], strides = [1, 1]} : vector<3x32xf32> to vector<1x32xf32>
    %6 = vector.shape_cast %5 : vector<1x32xf32> to vector<32xf32>
    %7 = vector.extract_strided_slice %2 {offsets = [2, 0], sizes = [1, 32], strides = [1, 1]} : vector<3x32xf32> to vector<1x32xf32>
    %8 = vector.shape_cast %7 : vector<1x32xf32> to vector<32xf32>
    %cst = arith.constant dense<0.000000e+00> : vector<2x32xf32>
    %9 = tpu.matmul %0, %1, %cst {dimension_numbers = #tpu.dot_dimension_numbers<[1], [0], [0], [1], [0, 0, 1, 1], [], []>} : vector<2x32xf32>, vector<32x32xf32>, vector<2x32xf32> -> vector<2x32xf32>
    %10 = vector.shape_cast %4 : vector<32xf32> to vector<1x32xf32>
    %11 = vector.broadcast %10 : vector<1x32xf32> to vector<2x32xf32>
    %12 = arith.addf %9, %11 : vector<2x32xf32>
    %cst_5 = arith.constant dense<0.000000e+00> : vector<2xf32>
    %13 = vector.multi_reduction <add>, %12, %cst_5 [1] : vector<2x32xf32> to vector<2xf32>
    %14 = vector.shape_cast %13 : vector<2xf32> to vector<2x1xf32>
    %cst_6 = arith.constant 3.200000e+01 : f32
    %15 = vector.broadcast %cst_6 : f32 to vector<2x1xf32>
    %16 = arith.divf %14, %15 : vector<2x1xf32>
    %17 = arith.mulf %12, %12 : vector<2x32xf32>
    %cst_7 = arith.constant dense<0.000000e+00> : vector<2xf32>
    %18 = vector.multi_reduction <add>, %17, %cst_7 [1] : vector<2x32xf32> to vector<2xf32>
    %19 = vector.shape_cast %18 : vector<2xf32> to vector<2x1xf32>
    %cst_8 = arith.constant 3.200000e+01 : f32
    %20 = vector.broadcast %cst_8 : f32 to vector<2x1xf32>
    %21 = arith.divf %19, %20 : vector<2x1xf32>
    %22 = arith.mulf %16, %16 : vector<2x1xf32>
    %23 = arith.subf %21, %22 : vector<2x1xf32>
    %24 = vector.broadcast %16 : vector<2x1xf32> to vector<2x32xf32>
    %25 = arith.subf %12, %24 : vector<2x32xf32>
    %cst_9 = arith.constant 9.99999974E-6 : f32
    %26 = vector.broadcast %cst_9 : f32 to vector<2x1xf32>
    %27 = arith.addf %23, %26 : vector<2x1xf32>
    %28 = math.rsqrt %27 : vector<2x1xf32>
    %29 = vector.broadcast %28 : vector<2x1xf32> to vector<2x32xf32>
    %30 = arith.mulf %25, %29 : vector<2x32xf32>
    %31 = vector.shape_cast %6 : vector<32xf32> to vector<1x32xf32>
    %32 = vector.broadcast %31 : vector<1x32xf32> to vector<2x32xf32>
    %33 = arith.mulf %30, %32 : vector<2x32xf32>
    %34 = vector.shape_cast %8 : vector<32xf32> to vector<1x32xf32>
    %35 = vector.broadcast %34 : vector<1x32xf32> to vector<2x32xf32>
    %36 = arith.addf %33, %35 : vector<2x32xf32>
    %cst_10 = arith.constant 5.000000e-01 : f32
    %37 = vector.broadcast %cst_10 : f32 to vector<2x32xf32>
    %38 = arith.mulf %37, %36 : vector<2x32xf32>
    %cst_11 = arith.constant 0.707106769 : f32
    %39 = vector.broadcast %cst_11 : f32 to vector<2x32xf32>
    %40 = arith.mulf %36, %39 : vector<2x32xf32>
    %41 = math.erf %40 : vector<2x32xf32>
    %cst_12 = arith.constant 1.000000e+00 : f32
    %42 = vector.broadcast %cst_12 : f32 to vector<2x32xf32>
    %43 = arith.addf %42, %41 : vector<2x32xf32>
    %44 = arith.mulf %38, %43 : vector<2x32xf32>
    %c0_13 = arith.constant 0 : index
    %c0_14 = arith.constant 0 : index
    %45 = vector.load %arg2[%c0_13, %c0_14] : memref<2x32xf32, #tpu.memory_space<vmem>>, vector<2x32xf32>
    %c0_15 = arith.constant 0 : index
    %c0_16 = arith.constant 0 : index
    %46 = vector.load %arg5[%c0_15, %c0_16] : memref<32x32xf32, #tpu.memory_space<vmem>>, vector<32x32xf32>
    %c0_17 = arith.constant 0 : index
    %c0_18 = arith.constant 0 : index
    %47 = vector.load %arg6[%c0_17, %c0_18] : memref<3x32xf32, #tpu.memory_space<vmem>>, vector<3x32xf32>
    %48 = vector.extract_strided_slice %47 {offsets = [0, 0], sizes = [1, 32], strides = [1, 1]} : vector<3x32xf32> to vector<1x32xf32>
    %49 = vector.shape_cast %48 : vector<1x32xf32> to vector<32xf32>
    %50 = vector.extract_strided_slice %47 {offsets = [1, 0], sizes = [1, 32], strides = [1, 1]} : vector<3x32xf32> to vector<1x32xf32>
    %51 = vector.shape_cast %50 : vector<1x32xf32> to vector<32xf32>
    %52 = vector.extract_strided_slice %47 {offsets = [2, 0], sizes = [1, 32], strides = [1, 1]} : vector<3x32xf32> to vector<1x32xf32>
    %53 = vector.shape_cast %52 : vector<1x32xf32> to vector<32xf32>
    %cst_19 = arith.constant dense<0.000000e+00> : vector<2x32xf32>
    %54 = tpu.matmul %45, %46, %cst_19 {dimension_numbers = #tpu.dot_dimension_numbers<[1], [0], [0], [1], [0, 0, 1, 1], [], []>} : vector<2x32xf32>, vector<32x32xf32>, vector<2x32xf32> -> vector<2x32xf32>
    %55 = vector.shape_cast %49 : vector<32xf32> to vector<1x32xf32>
    %56 = vector.broadcast %55 : vector<1x32xf32> to vector<2x32xf32>
    %57 = arith.addf %54, %56 : vector<2x32xf32>
    %cst_20 = arith.constant dense<0.000000e+00> : vector<2xf32>
    %58 = vector.multi_reduction <add>, %57, %cst_20 [1] : vector<2x32xf32> to vector<2xf32>
    %59 = vector.shape_cast %58 : vector<2xf32> to vector<2x1xf32>
    %cst_21 = arith.constant 3.200000e+01 : f32
    %60 = vector.broadcast %cst_21 : f32 to vector<2x1xf32>
    %61 = arith.divf %59, %60 : vector<2x1xf32>
    %62 = arith.mulf %57, %57 : vector<2x32xf32>
    %cst_22 = arith.constant dense<0.000000e+00> : vector<2xf32>
    %63 = vector.multi_reduction <add>, %62, %cst_22 [1] : vector<2x32xf32> to vector<2xf32>
    %64 = vector.shape_cast %63 : vector<2xf32> to vector<2x1xf32>
    %cst_23 = arith.constant 3.200000e+01 : f32
    %65 = vector.broadcast %cst_23 : f32 to vector<2x1xf32>
    %66 = arith.divf %64, %65 : vector<2x1xf32>
    %67 = arith.mulf %61, %61 : vector<2x1xf32>
    %68 = arith.subf %66, %67 : vector<2x1xf32>
    %69 = vector.broadcast %61 : vector<2x1xf32> to vector<2x32xf32>
    %70 = arith.subf %57, %69 : vector<2x32xf32>
    %cst_24 = arith.constant 9.99999974E-6 : f32
    %71 = vector.broadcast %cst_24 : f32 to vector<2x1xf32>
    %72 = arith.addf %68, %71 : vector<2x1xf32>
    %73 = math.rsqrt %72 : vector<2x1xf32>
    %74 = vector.broadcast %73 : vector<2x1xf32> to vector<2x32xf32>
    %75 = arith.mulf %70, %74 : vector<2x32xf32>
    %76 = vector.shape_cast %51 : vector<32xf32> to vector<1x32xf32>
    %77 = vector.broadcast %76 : vector<1x32xf32> to vector<2x32xf32>
    %78 = arith.mulf %75, %77 : vector<2x32xf32>
    %79 = vector.shape_cast %53 : vector<32xf32> to vector<1x32xf32>
    %80 = vector.broadcast %79 : vector<1x32xf32> to vector<2x32xf32>
    %81 = arith.addf %78, %80 : vector<2x32xf32>
    %cst_25 = arith.constant 5.000000e-01 : f32
    %82 = vector.broadcast %cst_25 : f32 to vector<2x32xf32>
    %83 = arith.mulf %82, %81 : vector<2x32xf32>
    %cst_26 = arith.constant 0.707106769 : f32
    %84 = vector.broadcast %cst_26 : f32 to vector<2x32xf32>
    %85 = arith.mulf %81, %84 : vector<2x32xf32>
    %86 = math.erf %85 : vector<2x32xf32>
    %cst_27 = arith.constant 1.000000e+00 : f32
    %87 = vector.broadcast %cst_27 : f32 to vector<2x32xf32>
    %88 = arith.addf %87, %86 : vector<2x32xf32>
    %89 = arith.mulf %83, %88 : vector<2x32xf32>
    %c0_28 = arith.constant 0 : index
    %c0_29 = arith.constant 0 : index
    %90 = vector.load %arg7[%c0_28, %c0_29] : memref<2x32xf32, #tpu.memory_space<vmem>>, vector<2x32xf32>
    %91 = vector.extract_strided_slice %90 {offsets = [0, 0], sizes = [1, 32], strides = [1, 1]} : vector<2x32xf32> to vector<1x32xf32>
    %92 = vector.shape_cast %91 : vector<1x32xf32> to vector<32xf32>
    %93 = vector.shape_cast %92 : vector<32xf32> to vector<1x32xf32>
    %94 = vector.broadcast %93 : vector<1x32xf32> to vector<2x32xf32>
    %95 = arith.mulf %44, %94 : vector<2x32xf32>
    %cst_30 = arith.constant dense<0.000000e+00> : vector<2xf32>
    %96 = vector.multi_reduction <add>, %95, %cst_30 [1] : vector<2x32xf32> to vector<2xf32>
    %97 = vector.shape_cast %96 : vector<2xf32> to vector<2x1xf32>
    %98 = vector.extract_strided_slice %90 {offsets = [1, 0], sizes = [1, 32], strides = [1, 1]} : vector<2x32xf32> to vector<1x32xf32>
    %99 = vector.shape_cast %98 : vector<1x32xf32> to vector<32xf32>
    %100 = vector.shape_cast %99 : vector<32xf32> to vector<1x32xf32>
    %101 = vector.broadcast %100 : vector<1x32xf32> to vector<2x32xf32>
    %102 = arith.mulf %89, %101 : vector<2x32xf32>
    %cst_31 = arith.constant dense<0.000000e+00> : vector<2xf32>
    %103 = vector.multi_reduction <add>, %102, %cst_31 [1] : vector<2x32xf32> to vector<2xf32>
    %104 = vector.shape_cast %103 : vector<2xf32> to vector<2x1xf32>
    %105 = arith.addf %97, %104 : vector<2x1xf32>
    %c0_32 = arith.constant 0 : index
    %c0_33 = arith.constant 0 : index
    %106 = memref.load %arg8[%c0_32, %c0_33] : memref<1x1xf32, #tpu.memory_space<smem>>
    %107 = vector.broadcast %106 : f32 to vector<2x1xf32>
    %108 = arith.addf %105, %107 : vector<2x1xf32>
    %109 = arith.negf %108 : vector<2x1xf32>
    %110 = math.exp %109 : vector<2x1xf32>
    %cst_34 = arith.constant 1.000000e+00 : f32
    %111 = vector.broadcast %cst_34 : f32 to vector<2x1xf32>
    %112 = arith.addf %111, %110 : vector<2x1xf32>
    %113 = arith.divf %111, %112 : vector<2x1xf32>
    %114 = vector.broadcast %113 : vector<2x1xf32> to vector<2x32xf32>
    %115 = arith.mulf %114, %44 : vector<2x32xf32>
    %cst_35 = arith.constant 1.000000e+00 : f32
    %116 = vector.broadcast %cst_35 : f32 to vector<2x1xf32>
    %117 = arith.subf %116, %113 : vector<2x1xf32>
    %118 = vector.broadcast %117 : vector<2x1xf32> to vector<2x32xf32>
    %119 = arith.mulf %118, %89 : vector<2x32xf32>
    %120 = arith.addf %115, %119 : vector<2x32xf32>
    %c0_36 = arith.constant 0 : index
    %c0_37 = arith.constant 0 : index
    %121 = vector.load %arg14[%c0_36, %c0_37] : memref<2x32xf32, #tpu.memory_space<vmem>>, vector<2x32xf32>
    tpu.vector_store %arg14[%c0_36, %c0_37], %120 {strides = array<i32>} : memref<2x32xf32, #tpu.memory_space<vmem>>, vector<2x32xf32>,
    %c0_38 = arith.constant 0 : index
    %c0_39 = arith.constant 0 : index
    %122 = vector.load %arg9[%c0_38, %c0_39] : memref<32x32xf32, #tpu.memory_space<vmem>>, vector<32x32xf32>
    %c0_40 = arith.constant 0 : index
    %c0_41 = arith.constant 0 : index
    %123 = vector.load %arg10[%c0_40, %c0_41] : memref<1x32xf32, #tpu.memory_space<vmem>>, vector<1x32xf32>
    %c0_42 = arith.constant 0 : index
    %c0_43 = arith.constant 0 : index
    %124 = vector.load %arg11[%c0_42, %c0_43] : memref<32x128xf32, #tpu.memory_space<vmem>>, vector<32x128xf32>
    %c0_44 = arith.constant 0 : index
    %c0_45 = arith.constant 0 : index
    %125 = vector.load %arg12[%c0_44, %c0_45] : memref<1x128xf32, #tpu.memory_space<vmem>>, vector<1x128xf32>
    %cst_46 = arith.constant dense<0.000000e+00> : vector<2x32xf32>
    %126 = tpu.matmul %120, %122, %cst_46 {dimension_numbers = #tpu.dot_dimension_numbers<[1], [0], [0], [1], [0, 0, 1, 1], [], []>} : vector<2x32xf32>, vector<32x32xf32>, vector<2x32xf32> -> vector<2x32xf32>
    %127 = vector.broadcast %123 : vector<1x32xf32> to vector<2x32xf32>
    %128 = arith.addf %126, %127 : vector<2x32xf32>
    %cst_47 = arith.constant 5.000000e-01 : f32
    %129 = vector.broadcast %cst_47 : f32 to vector<2x32xf32>
    %130 = arith.mulf %129, %128 : vector<2x32xf32>
    %cst_48 = arith.constant 0.707106769 : f32
    %131 = vector.broadcast %cst_48 : f32 to vector<2x32xf32>
    %132 = arith.mulf %128, %131 : vector<2x32xf32>
    %133 = math.erf %132 : vector<2x32xf32>
    %cst_49 = arith.constant 1.000000e+00 : f32
    %134 = vector.broadcast %cst_49 : f32 to vector<2x32xf32>
    %135 = arith.addf %134, %133 : vector<2x32xf32>
    %136 = arith.mulf %130, %135 : vector<2x32xf32>
    %cst_50 = arith.constant dense<0.000000e+00> : vector<2x128xf32>
    %137 = tpu.matmul %136, %124, %cst_50 {dimension_numbers = #tpu.dot_dimension_numbers<[1], [0], [0], [1], [0, 0, 1, 1], [], []>} : vector<2x32xf32>, vector<32x128xf32>, vector<2x128xf32> -> vector<2x128xf32>
    %138 = vector.broadcast %125 : vector<1x128xf32> to vector<2x128xf32>
    %139 = arith.addf %137, %138 : vector<2x128xf32>
    %c0_51 = arith.constant 0 : index
    %c0_52 = arith.constant 0 : index
    %140 = vector.load %arg13[%c0_51, %c0_52] : memref<2x128xf32, #tpu.memory_space<vmem>>, vector<2x128xf32>
    tpu.vector_store %arg13[%c0_51, %c0_52], %139 {strides = array<i32>} : memref<2x128xf32, #tpu.memory_space<vmem>>, vector<2x128xf32>,
    return
  }
  func.func @transform_0(%arg0: i32) -> (i32, i32) {
    %c0_i32 = arith.constant 0 : i32
    %c0_i32_0 = arith.constant 0 : i32
    return %arg0, %c0_i32 : i32, i32
  }
  func.func @transform_1(%arg0: i32) -> (i32, i32) {
    %c0_i32 = arith.constant 0 : i32
    %c0_i32_0 = arith.constant 0 : i32
    return %arg0, %c0_i32 : i32, i32
  }
  func.func @transform_2(%arg0: i32) -> (i32, i32) {
    %c0_i32 = arith.constant 0 : i32
    %c0_i32_0 = arith.constant 0 : i32
    %c0_i32_1 = arith.constant 0 : i32
    return %c0_i32, %c0_i32_0 : i32, i32
  }
  func.func @transform_3(%arg0: i32) -> (i32, i32) {
    %c0_i32 = arith.constant 0 : i32
    %c0_i32_0 = arith.constant 0 : i32
    %c0_i32_1 = arith.constant 0 : i32
    return %c0_i32, %c0_i32_0 : i32, i32
  }
  func.func @transform_4(%arg0: i32) -> (i32, i32) {
    %c0_i32 = arith.constant 0 : i32
    %c0_i32_0 = arith.constant 0 : i32
    %c0_i32_1 = arith.constant 0 : i32
    return %c0_i32, %c0_i32_0 : i32, i32
  }
  func.func @transform_5(%arg0: i32) -> (i32, i32) {
    %c0_i32 = arith.constant 0 : i32
    %c0_i32_0 = arith.constant 0 : i32
    %c0_i32_1 = arith.constant 0 : i32
    return %c0_i32, %c0_i32_0 : i32, i32
  }
  func.func @transform_6(%arg0: i32) -> (i32, i32) {
    %c0_i32 = arith.constant 0 : i32
    %c0_i32_0 = arith.constant 0 : i32
    %c0_i32_1 = arith.constant 0 : i32
    return %c0_i32, %c0_i32_0 : i32, i32
  }
  func.func @transform_7(%arg0: i32) -> (i32, i32) {
    %c0_i32 = arith.constant 0 : i32
    %c0_i32_0 = arith.constant 0 : i32
    %c0_i32_1 = arith.constant 0 : i32
    return %c0_i32, %c0_i32_0 : i32, i32
  }
  func.func @transform_8(%arg0: i32) -> (i32, i32) {
    %c0_i32 = arith.constant 0 : i32
    %c0_i32_0 = arith.constant 0 : i32
    %c0_i32_1 = arith.constant 0 : i32
    return %c0_i32, %c0_i32_0 : i32, i32
  }
  func.func @transform_9(%arg0: i32) -> (i32, i32) {
    %c0_i32 = arith.constant 0 : i32
    %c0_i32_0 = arith.constant 0 : i32
    %c0_i32_1 = arith.constant 0 : i32
    return %c0_i32, %c0_i32_0 : i32, i32
  }
  func.func @transform_10(%arg0: i32) -> (i32, i32) {
    %c0_i32 = arith.constant 0 : i32
    %c0_i32_0 = arith.constant 0 : i32
    %c0_i32_1 = arith.constant 0 : i32
    return %c0_i32, %c0_i32_0 : i32, i32
  }
  func.func @transform_11(%arg0: i32) -> (i32, i32) {
    %c0_i32 = arith.constant 0 : i32
    %c0_i32_0 = arith.constant 0 : i32
    %c0_i32_1 = arith.constant 0 : i32
    return %c0_i32, %c0_i32_0 : i32, i32
  }
  func.func @transform_12(%arg0: i32) -> (i32, i32) {
    %c0_i32 = arith.constant 0 : i32
    %c0_i32_0 = arith.constant 0 : i32
    return %arg0, %c0_i32 : i32, i32
  }
  func.func @transform_13(%arg0: i32) -> (i32, i32) {
    %c0_i32 = arith.constant 0 : i32
    %c0_i32_0 = arith.constant 0 : i32
    return %arg0, %c0_i32 : i32, i32
  }
}

</mosaic_0001>

<llo_original>
// kernel: tpu_custom_call.1
$region0: #{tpu_custom_call.1}
  #allocation0 [shape = 'u32[]', space=smem, size = 0x4, offset = 0x4, fixed_abs, tag = 'smem constant byte address 0x4 - core index']
  #allocation1 [shape = 'u32[144,128]{1,0:T(1,128)}', space=vmem, size = 0x12000, scoped, tag = 'internal scratch']
  #allocation2 [shape = 'f32[1,1]{1,0:T(1,128)S(6)}', space=smem, size = 0x200, scoped, tag = 'scoped memory for tpu_custom_call.1']
  %s0 = inlined_call_operand.hbm [shape: f32[2,32], index: 0, kind: input, shape index: {}]
  %s1 = inlined_call_operand.hbm [shape: f32[2,32], index: 1, kind: input, shape index: {}]
  %s2 = inlined_call_operand.hbm [shape: f32[32,32], index: 2, kind: input, shape index: {}]
  %s3 = inlined_call_operand.vmem [shape: f32[3,32], index: 3, kind: input, shape index: {}]
  %s4 = inlined_call_operand.hbm [shape: f32[32,32], index: 4, kind: input, shape index: {}]
  %s5 = inlined_call_operand.hbm [shape: f32[3,32], index: 5, kind: input, shape index: {}]
  %s6 = inlined_call_operand.hbm [shape: f32[2,32], index: 6, kind: input, shape index: {}]
  %s7 = inlined_call_operand.<no memory space> [shape: f32[1,1], index: 7, kind: input, shape index: {}]
  %s8 = inlined_call_operand.hbm [shape: f32[32,32], index: 8, kind: input, shape index: {}]
  %s9 = inlined_call_operand.vmem [shape: f32[1,32], index: 9, kind: input, shape index: {}]
  %s10 = inlined_call_operand.vmem [shape: f32[32,128], index: 10, kind: input, shape index: {}]
  %s11 = inlined_call_operand.vmem [shape: f32[1,128], index: 11, kind: input, shape index: {}]
  %s12 = inlined_call_operand.hbm [shape: f32[2,128], index: 12, kind: output, shape index: {0}]
  %s13 = inlined_call_operand.hbm [shape: f32[2,32], index: 13, kind: output, shape index: {1}]
  %14 = xla_tuple %s12, %s13
  %s15 = sld [smem:[#allocation0]]
  $region94: #{tpu_custom_call.1} parent=0
    _
  %s17 = ssub.s32 1, %s15
  %s18 = scalar_select 0, %s17, %s15
  %19 = sst [smem:[#allocation2]] %s7
  $region1: #{tpu_custom_call.1} parent=0
    #allocation3 [shape = 'u8[1024]{0}', space=vmem, size = 0x400, scoped, tag = 'input window, operand 0, single buffered']
    #allocation4 [shape = 's32[1]{0}', space=sflag, size = 0x4, scoped, tag = 'scoped memory for tpu_custom_call.1']
    #allocation5 [shape = 's32[1]{0}', space=sflag, size = 0x4, scoped, tag = 'scoped memory for tpu_custom_call.1']
    #allocation6 [shape = 'u8[1024]{0}', space=vmem, size = 0x400, scoped, tag = 'input window, operand 1, single buffered']
    #allocation7 [shape = 's32[1]{0}', space=sflag, size = 0x4, scoped, tag = 'scoped memory for tpu_custom_call.1']
    #allocation8 [shape = 'u8[16384]{0}', space=vmem, size = 0x4000, scoped, tag = 'input window, operand 2, single buffered']
    #allocation9 [shape = 'u8[16384]{0}', space=vmem, size = 0x4000, scoped, tag = 'input window, operand 4, single buffered']
    #allocation10 [shape = 's32[1]{0}', space=sflag, size = 0x4, scoped, tag = 'scoped memory for tpu_custom_call.1']
    #allocation11 [shape = 'u8[2048]{0}', space=vmem, size = 0x800, scoped, tag = 'input window, operand 5, single buffered']
    #allocation12 [shape = 'u8[1024]{0}', space=vmem, size = 0x400, scoped, tag = 'input window, operand 6, single buffered']
    #allocation13 [shape = 's32[1]{0}', space=sflag, size = 0x4, scoped, tag = 'scoped memory for tpu_custom_call.1']
    #allocation14 [shape = 'u8[16384]{0}', space=vmem, size = 0x4000, scoped, tag = 'input window, operand 8, single buffered']
    #allocation15 [shape = 'u8[1024]{0}', space=vmem, size = 0x400, scoped, tag = 'output window, operand 0, single buffered']
    #allocation16 [shape = 'u8[1024]{0}', space=vmem, size = 0x400, scoped, tag = 'output window, operand 1, single buffered']
    #allocation17 [shape = 's32[1]{0}', space=sflag, size = 0x4, scoped, tag = 'scoped memory for tpu_custom_call.1']
    %20 = vsyncpa [#allocation4], 0
    %21 = vsyncpa [#allocation7], 0
    %22 = vsyncpa [#allocation10], 0
    %23 = vsyncpa [#allocation13], 0
    %24 = vsyncpa [#allocation5], 0
    %25 = vsyncpa [#allocation17], 0
    // Predicated region
    $region2: #{tpu_custom_call.1} parent=1 // pred_check
      _
    $region3: #{tpu_custom_call.1} parent=1 // pred_check_branch
      %27 = sbr.rel (0) target = $region5
    $region4: #{tpu_custom_call.1} parent=1 // pred_region
      %s29 = ssub.s32 32, 32
      %30 = vsyncadd [#allocation4], %s29
      %s32 = sshll.u32 [#allocation3], 4
      %s33 = int_to_ptr.vmem [resolvable:$true] %s32
      %35 = dma.hbm_to_vmem [thread:$0]  %s0, 32, %s33, [#allocation4]
    $region5: #{tpu_custom_call.1} parent=1 // pred_fallthru
      _
    // Predicated region
    $region6: #{tpu_custom_call.1} parent=1 // pred_check
      _
    $region7: #{tpu_custom_call.1} parent=1 // pred_check_branch
      %37 = sbr.rel (0) target = $region9
    $region8: #{tpu_custom_call.1} parent=1 // pred_region
      %s39 = ssub.s32 32, 32
      %40 = vsyncadd [#allocation7], %s39
      %s42 = sshll.u32 [#allocation6], 4
      %s43 = int_to_ptr.vmem [resolvable:$true] %s42
      %45 = dma.hbm_to_vmem [thread:$0]  %s1, 32, %s43, [#allocation7]
    $region9: #{tpu_custom_call.1} parent=1 // pred_fallthru
      _
    // Predicated region
    $region10: #{tpu_custom_call.1} parent=1 // pred_check
      _
    $region11: #{tpu_custom_call.1} parent=1 // pred_check_branch
      %47 = sbr.rel (0) target = $region13
    $region12: #{tpu_custom_call.1} parent=1 // pred_region
      %s49 = ssub.s32 512, 512
      %50 = vsyncadd [#allocation7], %s49
      %s51 = sshll.u32 [#allocation8], 4
      %s52 = int_to_ptr.vmem [resolvable:$true] %s51
      %57 = dma.hbm_to_vmem [thread:$0]  %s2, 512, %s52, [#allocation7], 128, 128, 8
    $region13: #{tpu_custom_call.1} parent=1 // pred_fallthru
      _
    // Predicated region
    $region14: #{tpu_custom_call.1} parent=1 // pred_check
      _
    $region15: #{tpu_custom_call.1} parent=1 // pred_check_branch
      %59 = sbr.rel (0) target = $region17
    $region16: #{tpu_custom_call.1} parent=1 // pred_region
      _
    $region17: #{tpu_custom_call.1} parent=1 // pred_fallthru
      _
    // Predicated region
    $region18: #{tpu_custom_call.1} parent=1 // pred_check
      _
    $region19: #{tpu_custom_call.1} parent=1 // pred_check_branch
      %61 = sbr.rel (0) target = $region21
    $region20: #{tpu_custom_call.1} parent=1 // pred_region
      %s63 = ssub.s32 512, 512
      %64 = vsyncadd [#allocation10], %s63
      %s65 = sshll.u32 [#allocation9], 4
      %s66 = int_to_ptr.vmem [resolvable:$true] %s65
      %71 = dma.hbm_to_vmem [thread:$0]  %s4, 512, %s66, [#allocation10], 128, 128, 8
    $region21: #{tpu_custom_call.1} parent=1 // pred_fallthru
      _
    // Predicated region
    $region22: #{tpu_custom_call.1} parent=1 // pred_check
      _
    $region23: #{tpu_custom_call.1} parent=1 // pred_check_branch
      %73 = sbr.rel (0) target = $region25
    $region24: #{tpu_custom_call.1} parent=1 // pred_region
      %s75 = ssub.s32 64, 64
      %76 = vsyncadd [#allocation10], %s75
      %s78 = sshll.u32 [#allocation11], 4
      %s79 = int_to_ptr.vmem [resolvable:$true] %s78
      %81 = dma.hbm_to_vmem [thread:$0]  %s5, 64, %s79, [#allocation10]
    $region25: #{tpu_custom_call.1} parent=1 // pred_fallthru
      _
    // Predicated region
    $region26: #{tpu_custom_call.1} parent=1 // pred_check
      _
    $region27: #{tpu_custom_call.1} parent=1 // pred_check_branch
      %83 = sbr.rel (0) target = $region29
    $region28: #{tpu_custom_call.1} parent=1 // pred_region
      %s85 = ssub.s32 32, 32
      %86 = vsyncadd [#allocation13], %s85
      %s88 = sshll.u32 [#allocation12], 4
      %s89 = int_to_ptr.vmem [resolvable:$true] %s88
      %91 = dma.hbm_to_vmem [thread:$0]  %s6, 32, %s89, [#allocation13]
    $region29: #{tpu_custom_call.1} parent=1 // pred_fallthru
      _
    // Predicated region
    $region30: #{tpu_custom_call.1} parent=1 // pred_check
      _
    $region31: #{tpu_custom_call.1} parent=1 // pred_check_branch
      %93 = sbr.rel (0) target = $region33
    $region32: #{tpu_custom_call.1} parent=1 // pred_region
      _
    $region33: #{tpu_custom_call.1} parent=1 // pred_fallthru
      _
    // Predicated region
    $region34: #{tpu_custom_call.1} parent=1 // pred_check
      _
    $region35: #{tpu_custom_call.1} parent=1 // pred_check_branch
      %95 = sbr.rel (0) target = $region37
    $region36: #{tpu_custom_call.1} parent=1 // pred_region
      %s97 = ssub.s32 512, 512
      %98 = vsyncadd [#allocation13], %s97
      %s99 = sshll.u32 [#allocation14], 4
      %s100 = int_to_ptr.vmem [resolvable:$true] %s99
      %105 = dma.hbm_to_vmem [thread:$0]  %s8, 512, %s100, [#allocation13], 128, 128, 8
    $region37: #{tpu_custom_call.1} parent=1 // pred_fallthru
      _
    // Predicated region
    $region38: #{tpu_custom_call.1} parent=1 // pred_check
      _
    $region39: #{tpu_custom_call.1} parent=1 // pred_check_branch
      %107 = sbr.rel (0) target = $region41
    $region40: #{tpu_custom_call.1} parent=1 // pred_region
      _
    $region41: #{tpu_custom_call.1} parent=1 // pred_fallthru
      _
    // Predicated region
    $region42: #{tpu_custom_call.1} parent=1 // pred_check
      _
    $region43: #{tpu_custom_call.1} parent=1 // pred_check_branch
      %109 = sbr.rel (0) target = $region45
    $region44: #{tpu_custom_call.1} parent=1 // pred_region
      _
    $region45: #{tpu_custom_call.1} parent=1 // pred_fallthru
      _
    // Predicated region
    $region46: #{tpu_custom_call.1} parent=1 // pred_check
      _
    $region47: #{tpu_custom_call.1} parent=1 // pred_check_branch
      %111 = sbr.rel (0) target = $region49
    $region48: #{tpu_custom_call.1} parent=1 // pred_region
      _
    $region49: #{tpu_custom_call.1} parent=1 // pred_fallthru
      _
    // Predicated region
    $region50: #{tpu_custom_call.1} parent=1 // pred_check
      _
    $region51: #{tpu_custom_call.1} parent=1 // pred_check_branch
      %113 = sbr.rel (0) target = $region53
    $region52: #{tpu_custom_call.1} parent=1 // pred_region
      %114 = dma.done [#allocation4], 32
    $region53: #{tpu_custom_call.1} parent=1 // pred_fallthru
      _
    // Predicated region
    $region54: #{tpu_custom_call.1} parent=1 // pred_check
      _
    $region55: #{tpu_custom_call.1} parent=1 // pred_check_branch
      %116 = sbr.rel (0) target = $region57
    $region56: #{tpu_custom_call.1} parent=1 // pred_region
      %117 = dma.done [#allocation7], 32
    $region57: #{tpu_custom_call.1} parent=1 // pred_fallthru
      _
    // Predicated region
    $region58: #{tpu_custom_call.1} parent=1 // pred_check
      _
    $region59: #{tpu_custom_call.1} parent=1 // pred_check_branch
      %119 = sbr.rel (0) target = $region61
    $region60: #{tpu_custom_call.1} parent=1 // pred_region
      %120 = dma.done [#allocation7], 512
    $region61: #{tpu_custom_call.1} parent=1 // pred_fallthru
      _
    // Predicated region
    $region62: #{tpu_custom_call.1} parent=1 // pred_check
      _
    $region63: #{tpu_custom_call.1} parent=1 // pred_check_branch
      %122 = sbr.rel (0) target = $region65
    $region64: #{tpu_custom_call.1} parent=1 // pred_region
      %123 = dma.done [#allocation10], 512
    $region65: #{tpu_custom_call.1} parent=1 // pred_fallthru
      _
    // Predicated region
    $region66: #{tpu_custom_call.1} parent=1 // pred_check
      _
    $region67: #{tpu_custom_call.1} parent=1 // pred_check_branch
      %125 = sbr.rel (0) target = $region69
    $region68: #{tpu_custom_call.1} parent=1 // pred_region
      %126 = dma.done [#allocation10], 64
    $region69: #{tpu_custom_call.1} parent=1 // pred_fallthru
      _
    // Predicated region
    $region70: #{tpu_custom_call.1} parent=1 // pred_check
      _
    $region71: #{tpu_custom_call.1} parent=1 // pred_check_branch
      %128 = sbr.rel (0) target = $region73
    $region72: #{tpu_custom_call.1} parent=1 // pred_region
      %129 = dma.done [#allocation13], 32
    $region73: #{tpu_custom_call.1} parent=1 // pred_fallthru
      _
    // Predicated region
    $region74: #{tpu_custom_call.1} parent=1 // pred_check
      _
    $region75: #{tpu_custom_call.1} parent=1 // pred_check_branch
      %131 = sbr.rel (0) target = $region77
    $region76: #{tpu_custom_call.1} parent=1 // pred_region
      %132 = dma.done [#allocation13], 512
    $region77: #{tpu_custom_call.1} parent=1 // pred_fallthru
      _
    %v133 = vld [vmem:[#allocation3] sm:$0x3]
    %v134 = vld [vmem:[#allocation8] sm:$0xff]
    %v135 = vld [vmem:[#allocation8 + $0x8] sm:$0xff]
    %v136 = vld [vmem:[#allocation8 + $0x10] sm:$0xff]
    %v137 = vld [vmem:[#allocation8 + $0x18] sm:$0xff]
    %v138 = vld [vmem:[%s3] sm:$0x7]
    %v139 = vlaneseq
    %v140 = vshrl.u32 %v139, 7
    %v141 = vsub.s32 0, %v140
    %v142 = vrot.slane %v138, %v141
    %vm143 = vcmask 261120
    %v145 = vsel %vm143, %v133, 0
    %147 = vmatprep.subr.mxu0 0.0
    %148 = vmatpush1.msra.mxu0 %v134
    %149 = vmatprep.subr.mxu0 0.0
    %150 = vmatpush1.msra.mxu0 %v135
    %151 = vmatprep.subr.mxu0 0.0
    %152 = vmatpush1.msra.mxu0 %v136
    %153 = vmatprep.subr.mxu0 0.0
    %154 = vmatpush1.msra.mxu0 %v137
    %155 = vmatprep.subr.mxu0 0.0
    %156 = vmatpush1.msra.mxu0 0.0
    %157 = vmatprep.subr.mxu0 0.0
    %158 = vmatpush1.msra.mxu0 0.0
    %159 = vmatprep.subr.mxu0 0.0
    %160 = vmatpush1.msra.mxu0 0.0
    %161 = vmatprep.subr.mxu0 0.0
    %162 = vmatpush1.msra.mxu0 0.0
    %163 = vmatprep.subr.mxu0 0.0
    %164 = vmatpush1.msra.mxu0 0.0
    %165 = vmatprep.subr.mxu0 0.0
    %166 = vmatpush1.msra.mxu0 0.0
    %167 = vmatprep.subr.mxu0 0.0
    %168 = vmatpush1.msra.mxu0 0.0
    %169 = vmatprep.subr.mxu0 0.0
    %170 = vmatpush1.msra.mxu0 0.0
    %171 = vmatprep.subr.mxu0 0.0
    %172 = vmatpush1.msra.mxu0 0.0
    %173 = vmatprep.subr.mxu0 0.0
    %174 = vmatpush1.msra.mxu0 0.0
    %175 = vmatprep.subr.mxu0 0.0
    %176 = vmatpush1.msra.mxu0 0.0
    %177 = vmatprep.subr.mxu0 0.0
    %178 = vmatpush1.msra.mxu0 0.0
    %179 = vmatprep.subr.mxu0 0.0
    %180 = vmatpush1.msra.mxu0 0.0
    %181 = vmatprep.subr.mxu0 0.0
    %182 = vmatpush1.msra.mxu0 0.0
    %183 = vmatprep.subr.mxu0 0.0
    %184 = vmatpush1.msra.mxu0 0.0
    %185 = vmatprep.subr.mxu0 0.0
    %186 = vmatpush1.msra.mxu0 0.0
    %187 = vmatprep.subr.mxu0 0.0
    %188 = vmatpush1.msra.mxu0 0.0
    %189 = vmatprep.subr.mxu0 0.0
    %190 = vmatpush1.msra.mxu0 0.0
    %191 = vmatprep.subr.mxu0 0.0
    %192 = vmatpush1.msra.mxu0 0.0
    %193 = vmatprep.subr.mxu0 0.0
    %194 = vmatpush1.msra.mxu0 0.0
    %195 = vmatprep.subr.mxu0 0.0
    %196 = vmatpush1.msra.mxu0 0.0
    %197 = vmatprep.subr.mxu0 0.0
    %198 = vmatpush1.msra.mxu0 0.0
    %199 = vmatprep.subr.mxu0 0.0
    %200 = vmatpush1.msra.mxu0 0.0
    %201 = vmatprep.subr.mxu0 0.0
    %202 = vmatpush1.msra.mxu0 0.0
    %203 = vmatprep.subr.mxu0 0.0
    %204 = vmatpush1.msra.mxu0 0.0
    %205 = vmatprep.subr.mxu0 0.0
    %206 = vmatpush1.msra.mxu0 0.0
    %207 = vmatprep.subr.mxu0 0.0
    %208 = vmatpush1.msra.mxu0 0.0
    %209 = vmatprep.subr.mxu0 0.0
    %210 = vmatpush1.msra.mxu0 0.0
    %211 = vmatprep.mubr.f32.mxu0 0.0
    %212 = vmatmul.mubr.f32.gmra.mrb[0].mxu0 %v145
    %v213 = vpop.f32.mrb[0].mxu0
    %v214 = vadd.f32 %v142, %v213
    %v215 = vpop.f32.mrb[0].mxu0
    %216 = vdwg.mxu0
    %vm217 = vcmask 254976
    %v218 = vsel %vm217, %v214, 0.0
    %219 = vadd.xlane.f32.xlu0 %v218
    %v220 = vpop.xlane.xlu0 %219
    %v221 = vrcp.pop 32.0
    %v222 = vmul.f32 %v220, %v221
    %v223 = vmul.f32 %v214, %v214
    %v224 = vsel %vm217, %v223, 0.0
    %225 = vadd.xlane.f32.xlu0 %v224
    %v226 = vpop.xlane.xlu0 %225
    %v227 = vmul.f32 %v226, %v221
    %v228 = vmul.f32 %v222, %v222
    %v229 = vsub.f32 %v227, %v228
    %v230 = vsub.f32 %v214, %v222
    %v231 = vadd.f32 %v229, 1e-05
    %v232 = vrsqrt.pop %v231
    %v233 = vmul.f32 %v230, %v232
    %v234 = vlaneseq
    %v235 = vshrl.u32 %v234, 7
    %v236 = vsub.s32 1, %v235
    %v237 = vrot.slane %v138, %v236
    %v238 = vmul.f32 %v233, %v237
    %v239 = vlaneseq
    %v240 = vshrl.u32 %v239, 7
    %v241 = vsub.s32 2, %v240
    %v242 = vrot.slane %v138, %v241
    %v243 = vadd.f32 %v238, %v242
    %v244 = vmul.f32 %v243, 0.5
    %v245 = vmul.f32 %v243, 0.70710677
    %v246 = verf.f32.pop %v245
    %v247 = vadd.f32 %v246, 1.0
    %v248 = vmul.f32 %v244, %v247
    %v249 = vld [vmem:[#allocation6] sm:$0x3]
    %v250 = vld [vmem:[#allocation9] sm:$0xff]
    %v251 = vld [vmem:[#allocation9 + $0x8] sm:$0xff]
    %v252 = vld [vmem:[#allocation9 + $0x10] sm:$0xff]
    %v253 = vld [vmem:[#allocation9 + $0x18] sm:$0xff]
    %v254 = vld [vmem:[#allocation11] sm:$0x7]
    %v255 = vlaneseq
    %v256 = vshrl.u32 %v255, 7
    %v257 = vsub.s32 0, %v256
    %v258 = vrot.slane %v254, %v257
    %v260 = vsel %vm143, %v249, 0
    %262 = vmatprep.subr.mxu0 0.0
    %263 = vmatpush1.msra.mxu0 %v250
    %264 = vmatprep.subr.mxu0 0.0
    %265 = vmatpush1.msra.mxu0 %v251
    %266 = vmatprep.subr.mxu0 0.0
    %267 = vmatpush1.msra.mxu0 %v252
    %268 = vmatprep.subr.mxu0 0.0
    %269 = vmatpush1.msra.mxu0 %v253
    %270 = vmatprep.subr.mxu0 0.0
    %271 = vmatpush1.msra.mxu0 0.0
    %272 = vmatprep.subr.mxu0 0.0
    %273 = vmatpush1.msra.mxu0 0.0
    %274 = vmatprep.subr.mxu0 0.0
    %275 = vmatpush1.msra.mxu0 0.0
    %276 = vmatprep.subr.mxu0 0.0
    %277 = vmatpush1.msra.mxu0 0.0
    %278 = vmatprep.subr.mxu0 0.0
    %279 = vmatpush1.msra.mxu0 0.0
    %280 = vmatprep.subr.mxu0 0.0
    %281 = vmatpush1.msra.mxu0 0.0
    %282 = vmatprep.subr.mxu0 0.0
    %283 = vmatpush1.msra.mxu0 0.0
    %284 = vmatprep.subr.mxu0 0.0
    %285 = vmatpush1.msra.mxu0 0.0
    %286 = vmatprep.subr.mxu0 0.0
    %287 = vmatpush1.msra.mxu0 0.0
    %288 = vmatprep.subr.mxu0 0.0
    %289 = vmatpush1.msra.mxu0 0.0
    %290 = vmatprep.subr.mxu0 0.0
    %291 = vmatpush1.msra.mxu0 0.0
    %292 = vmatprep.subr.mxu0 0.0
    %293 = vmatpush1.msra.mxu0 0.0
    %294 = vmatprep.subr.mxu0 0.0
    %295 = vmatpush1.msra.mxu0 0.0
    %296 = vmatprep.subr.mxu0 0.0
    %297 = vmatpush1.msra.mxu0 0.0
    %298 = vmatprep.subr.mxu0 0.0
    %299 = vmatpush1.msra.mxu0 0.0
    %300 = vmatprep.subr.mxu0 0.0
    %301 = vmatpush1.msra.mxu0 0.0
    %302 = vmatprep.subr.mxu0 0.0
    %303 = vmatpush1.msra.mxu0 0.0
    %304 = vmatprep.subr.mxu0 0.0
    %305 = vmatpush1.msra.mxu0 0.0
    %306 = vmatprep.subr.mxu0 0.0
    %307 = vmatpush1.msra.mxu0 0.0
    %308 = vmatprep.subr.mxu0 0.0
    %309 = vmatpush1.msra.mxu0 0.0
    %310 = vmatprep.subr.mxu0 0.0
    %311 = vmatpush1.msra.mxu0 0.0
    %312 = vmatprep.subr.mxu0 0.0
    %313 = vmatpush1.msra.mxu0 0.0
    %314 = vmatprep.subr.mxu0 0.0
    %315 = vmatpush1.msra.mxu0 0.0
    %316 = vmatprep.subr.mxu0 0.0
    %317 = vmatpush1.msra.mxu0 0.0
    %318 = vmatprep.subr.mxu0 0.0
    %319 = vmatpush1.msra.mxu0 0.0
    %320 = vmatprep.subr.mxu0 0.0
    %321 = vmatpush1.msra.mxu0 0.0
    %322 = vmatprep.subr.mxu0 0.0
    %323 = vmatpush1.msra.mxu0 0.0
    %324 = vmatprep.subr.mxu0 0.0
    %325 = vmatpush1.msra.mxu0 0.0
    %326 = vmatprep.mubr.f32.mxu0 0.0
    %327 = vmatmul.mubr.f32.gmra.mrb[0].mxu0 %v260
    %v328 = vpop.f32.mrb[0].mxu0
    %v329 = vadd.f32 %v258, %v328
    %v330 = vpop.f32.mrb[0].mxu0
    %331 = vdwg.mxu0
    %v332 = vsel %vm217, %v329, 0.0
    %333 = vadd.xlane.f32.xlu0 %v332
    %v334 = vpop.xlane.xlu0 %333
    %v335 = vmul.f32 %v334, %v221
    %v336 = vmul.f32 %v329, %v329
    %v337 = vsel %vm217, %v336, 0.0
    %338 = vadd.xlane.f32.xlu0 %v337
    %v339 = vpop.xlane.xlu0 %338
    %v340 = vmul.f32 %v339, %v221
    %v341 = vmul.f32 %v335, %v335
    %v342 = vsub.f32 %v340, %v341
    %v343 = vsub.f32 %v329, %v335
    %v344 = vadd.f32 %v342, 1e-05
    %v345 = vrsqrt.pop %v344
    %v346 = vmul.f32 %v343, %v345
    %v347 = vlaneseq
    %v348 = vshrl.u32 %v347, 7
    %v349 = vsub.s32 1, %v348
    %v350 = vrot.slane %v254, %v349
    %v351 = vmul.f32 %v346, %v350
    %v352 = vlaneseq
    %v353 = vshrl.u32 %v352, 7
    %v354 = vsub.s32 2, %v353
    %v355 = vrot.slane %v254, %v354
    %v356 = vadd.f32 %v351, %v355
    %v357 = vmul.f32 %v356, 0.5
    %v358 = vmul.f32 %v356, 0.70710677
    %v359 = verf.f32.pop %v358
    %v360 = vadd.f32 %v359, 1.0
    %v361 = vmul.f32 %v357, %v360
    %v362 = vld [vmem:[#allocation12] sm:$0x3]
    %v363 = vlaneseq
    %v364 = vshrl.u32 %v363, 7
    %v365 = vsub.s32 0, %v364
    %v366 = vrot.slane %v362, %v365
    %v367 = vmul.f32 %v248, %v366
    %v368 = vsel %vm217, %v367, 0.0
    %369 = vadd.xlane.f32.xlu0 %v368
    %v370 = vpop.xlane.xlu0 %369
    %v371 = vlaneseq
    %v372 = vshrl.u32 %v371, 7
    %v373 = vsub.s32 1, %v372
    %v374 = vrot.slane %v362, %v373
    %v375 = vmul.f32 %v361, %v374
    %v376 = vsel %vm217, %v375, 0.0
    %377 = vadd.xlane.f32.xlu0 %v376
    %v378 = vpop.xlane.xlu0 %377
    %v379 = vadd.f32 %v370, %v378
    %s380 = sld [smem:[#allocation2]]
    %v381 = vstv %s380
    %v382 = vadd.f32 %v379, %v381
    %v383 = vxor.u32 %v382, 2147483648
    %v384 = vmul.f32 %v383, 1.442695
    %v385 = vpow.pop %v384
    %v386 = vadd.f32 %v385, 1.0
    %v387 = vrcp.pop %v386
    %v388 = vmul.f32 1.0, %v387
    %v389 = vmul.f32 %v388, %v248
    %v390 = vsub.f32 1.0, %v388
    %v391 = vmul.f32 %v390, %v361
    %v392 = vadd.f32 %v389, %v391
    %393 = vst.msk [vmem:[#allocation16] sm:$0x3] %vm217, %v392
    %v394 = vld [vmem:[#allocation14] sm:$0xff]
    %v395 = vld [vmem:[#allocation14 + $0x8] sm:$0xff]
    %v396 = vld [vmem:[#allocation14 + $0x10] sm:$0xff]
    %v397 = vld [vmem:[#allocation14 + $0x18] sm:$0xff]
    %v398 = vld [vmem:[%s9] sm:$0x1]
    %v399 = vld [vmem:[%s10] sm:$0xff]
    %v400 = vld [vmem:[%s10 + $0x8] sm:$0xff]
    %v401 = vld [vmem:[%s10 + $0x10] sm:$0xff]
    %v402 = vld [vmem:[%s10 + $0x18] sm:$0xff]
    %v403 = vld [vmem:[%s11] sm:$0x1]
    %v405 = vlaneseq
    %v406 = vshrl.u32 %v405, 7
    %v407 = vsub.s32 0, %v406
    %v408 = vrot.slane %v398, %v407
    %v411 = vsel %vm143, %v392, 0
    %413 = vmatprep.subr.mxu0 0.0
    %414 = vmatpush1.msra.mxu0 %v394
    %415 = vmatprep.subr.mxu0 0.0
    %416 = vmatpush1.msra.mxu0 %v395
    %417 = vmatprep.subr.mxu0 0.0
    %418 = vmatpush1.msra.mxu0 %v396
    %419 = vmatprep.subr.mxu0 0.0
    %420 = vmatpush1.msra.mxu0 %v397
    %421 = vmatprep.subr.mxu0 0.0
    %422 = vmatpush1.msra.mxu0 0.0
    %423 = vmatprep.subr.mxu0 0.0
    %424 = vmatpush1.msra.mxu0 0.0
    %425 = vmatprep.subr.mxu0 0.0
    %426 = vmatpush1.msra.mxu0 0.0
    %427 = vmatprep.subr.mxu0 0.0
    %428 = vmatpush1.msra.mxu0 0.0
    %429 = vmatprep.subr.mxu0 0.0
    %430 = vmatpush1.msra.mxu0 0.0
    %431 = vmatprep.subr.mxu0 0.0
    %432 = vmatpush1.msra.mxu0 0.0
    %433 = vmatprep.subr.mxu0 0.0
    %434 = vmatpush1.msra.mxu0 0.0
    %435 = vmatprep.subr.mxu0 0.0
    %436 = vmatpush1.msra.mxu0 0.0
    %437 = vmatprep.subr.mxu0 0.0
    %438 = vmatpush1.msra.mxu0 0.0
    %439 = vmatprep.subr.mxu0 0.0
    %440 = vmatpush1.msra.mxu0 0.0
    %441 = vmatprep.subr.mxu0 0.0
    %442 = vmatpush1.msra.mxu0 0.0
    %443 = vmatprep.subr.mxu0 0.0
    %444 = vmatpush1.msra.mxu0 0.0
    %445 = vmatprep.subr.mxu0 0.0
    %446 = vmatpush1.msra.mxu0 0.0
    %447 = vmatprep.subr.mxu0 0.0
    %448 = vmatpush1.msra.mxu0 0.0
    %449 = vmatprep.subr.mxu0 0.0
    %450 = vmatpush1.msra.mxu0 0.0
    %451 = vmatprep.subr.mxu0 0.0
    %452 = vmatpush1.msra.mxu0 0.0
    %453 = vmatprep.subr.mxu0 0.0
    %454 = vmatpush1.msra.mxu0 0.0
    %455 = vmatprep.subr.mxu0 0.0
    %456 = vmatpush1.msra.mxu0 0.0
    %457 = vmatprep.subr.mxu0 0.0
    %458 = vmatpush1.msra.mxu0 0.0
    %459 = vmatprep.subr.mxu0 0.0
    %460 = vmatpush1.msra.mxu0 0.0
    %461 = vmatprep.subr.mxu0 0.0
    %462 = vmatpush1.msra.mxu0 0.0
    %463 = vmatprep.subr.mxu0 0.0
    %464 = vmatpush1.msra.mxu0 0.0
    %465 = vmatprep.subr.mxu0 0.0
    %466 = vmatpush1.msra.mxu0 0.0
    %467 = vmatprep.subr.mxu0 0.0
    %468 = vmatpush1.msra.mxu0 0.0
    %469 = vmatprep.subr.mxu0 0.0
    %470 = vmatpush1.msra.mxu0 0.0
    %471 = vmatprep.subr.mxu0 0.0
    %472 = vmatpush1.msra.mxu0 0.0
    %473 = vmatprep.subr.mxu0 0.0
    %474 = vmatpush1.msra.mxu0 0.0
    %475 = vmatprep.subr.mxu0 0.0
    %476 = vmatpush1.msra.mxu0 0.0
    %477 = vmatprep.mubr.f32.mxu0 0.0
    %478 = vmatmul.mubr.f32.gmra.mrb[0].mxu0 %v411
    %v479 = vpop.f32.mrb[0].mxu0
    %v480 = vadd.f32 %v408, %v479
    %v481 = vpop.f32.mrb[0].mxu0
    %482 = vdwg.mxu0
    %v483 = vmul.f32 %v480, 0.5
    %v484 = vmul.f32 %v480, 0.70710677
    %v485 = verf.f32.pop %v484
    %v486 = vadd.f32 %v485, 1.0
    %v487 = vmul.f32 %v483, %v486
    %v489 = vlaneseq
    %v490 = vshrl.u32 %v489, 7
    %v491 = vsub.s32 0, %v490
    %v492 = vrot.slane %v403, %v491
    %v495 = vsel %vm143, %v487, 0
    %497 = vmatprep.subr.mxu0 0.0
    %498 = vmatpush1.msra.mxu0 %v399
    %499 = vmatprep.subr.mxu0 0.0
    %500 = vmatpush1.msra.mxu0 %v400
    %501 = vmatprep.subr.mxu0 0.0
    %502 = vmatpush1.msra.mxu0 %v401
    %503 = vmatprep.subr.mxu0 0.0
    %504 = vmatpush1.msra.mxu0 %v402
    %505 = vmatprep.subr.mxu0 0.0
    %506 = vmatpush1.msra.mxu0 0.0
    %507 = vmatprep.subr.mxu0 0.0
    %508 = vmatpush1.msra.mxu0 0.0
    %509 = vmatprep.subr.mxu0 0.0
    %510 = vmatpush1.msra.mxu0 0.0
    %511 = vmatprep.subr.mxu0 0.0
    %512 = vmatpush1.msra.mxu0 0.0
    %513 = vmatprep.subr.mxu0 0.0
    %514 = vmatpush1.msra.mxu0 0.0
    %515 = vmatprep.subr.mxu0 0.0
    %516 = vmatpush1.msra.mxu0 0.0
    %517 = vmatprep.subr.mxu0 0.0
    %518 = vmatpush1.msra.mxu0 0.0
    %519 = vmatprep.subr.mxu0 0.0
    %520 = vmatpush1.msra.mxu0 0.0
    %521 = vmatprep.subr.mxu0 0.0
    %522 = vmatpush1.msra.mxu0 0.0
    %523 = vmatprep.subr.mxu0 0.0
    %524 = vmatpush1.msra.mxu0 0.0
    %525 = vmatprep.subr.mxu0 0.0
    %526 = vmatpush1.msra.mxu0 0.0
    %527 = vmatprep.subr.mxu0 0.0
    %528 = vmatpush1.msra.mxu0 0.0
    %529 = vmatprep.subr.mxu0 0.0
    %530 = vmatpush1.msra.mxu0 0.0
    %531 = vmatprep.subr.mxu0 0.0
    %532 = vmatpush1.msra.mxu0 0.0
    %533 = vmatprep.subr.mxu0 0.0
    %534 = vmatpush1.msra.mxu0 0.0
    %535 = vmatprep.subr.mxu0 0.0
    %536 = vmatpush1.msra.mxu0 0.0
    %537 = vmatprep.subr.mxu0 0.0
    %538 = vmatpush1.msra.mxu0 0.0
    %539 = vmatprep.subr.mxu0 0.0
    %540 = vmatpush1.msra.mxu0 0.0
    %541 = vmatprep.subr.mxu0 0.0
    %542 = vmatpush1.msra.mxu0 0.0
    %543 = vmatprep.subr.mxu0 0.0
    %544 = vmatpush1.msra.mxu0 0.0
    %545 = vmatprep.subr.mxu0 0.0
    %546 = vmatpush1.msra.mxu0 0.0
    %547 = vmatprep.subr.mxu0 0.0
    %548 = vmatpush1.msra.mxu0 0.0
    %549 = vmatprep.subr.mxu0 0.0
    %550 = vmatpush1.msra.mxu0 0.0
    %551 = vmatprep.subr.mxu0 0.0
    %552 = vmatpush1.msra.mxu0 0.0
    %553 = vmatprep.subr.mxu0 0.0
    %554 = vmatpush1.msra.mxu0 0.0
    %555 = vmatprep.subr.mxu0 0.0
    %556 = vmatpush1.msra.mxu0 0.0
    %557 = vmatprep.subr.mxu0 0.0
    %558 = vmatpush1.msra.mxu0 0.0
    %559 = vmatprep.subr.mxu0 0.0
    %560 = vmatpush1.msra.mxu0 0.0
    %561 = vmatprep.mubr.f32.mxu0 0.0
    %562 = vmatmul.mubr.f32.gmra.mrb[0].mxu0 %v495
    %v563 = vpop.f32.mrb[0].mxu0
    %v564 = vadd.f32 %v492, %v563
    %v565 = vpop.f32.mrb[0].mxu0
    %566 = vdwg.mxu0
    %567 = vst [vmem:[#allocation15] sm:$0x3] %v564
    // Predicated region
    $region78: #{tpu_custom_call.1} parent=1 // pred_check
      _
    $region79: #{tpu_custom_call.1} parent=1 // pred_check_branch
      %569 = sbr.rel (0) target = $region81
    $region80: #{tpu_custom_call.1} parent=1 // pred_region
      %s571 = ssub.s32 32, 32
      %572 = vsyncadd [#allocation5], %s571
      %s574 = sshll.u32 [#allocation15], 4
      %s575 = int_to_ptr.vmem [resolvable:$true] %s574
      %577 = dma.vmem_to_hbm [thread:$0]  %s575, 32, %s12, [#allocation5]
    $region81: #{tpu_custom_call.1} parent=1 // pred_fallthru
      _
    // Predicated region
    $region82: #{tpu_custom_call.1} parent=1 // pred_check
      _
    $region83: #{tpu_custom_call.1} parent=1 // pred_check_branch
      %579 = sbr.rel (0) target = $region85
    $region84: #{tpu_custom_call.1} parent=1 // pred_region
      %s581 = ssub.s32 32, 32
      %582 = vsyncadd [#allocation17], %s581
      %s584 = sshll.u32 [#allocation16], 4
      %s585 = int_to_ptr.vmem [resolvable:$true] %s584
      %587 = dma.vmem_to_hbm [thread:$0]  %s585, 32, %s13, [#allocation17]
    $region85: #{tpu_custom_call.1} parent=1 // pred_fallthru
      _
    // Predicated region
    $region86: #{tpu_custom_call.1} parent=1 // pred_check
      _
    $region87: #{tpu_custom_call.1} parent=1 // pred_check_branch
      %589 = sbr.rel (0) target = $region89
    $region88: #{tpu_custom_call.1} parent=1 // pred_region
      %590 = dma.done [#allocation5], 32
    $region89: #{tpu_custom_call.1} parent=1 // pred_fallthru
      _
    // Predicated region
    $region90: #{tpu_custom_call.1} parent=1 // pred_check
      _
    $region91: #{tpu_custom_call.1} parent=1 // pred_check_branch
      %592 = sbr.rel (0) target = $region93
    $region92: #{tpu_custom_call.1} parent=1 // pred_region
      %593 = dma.done [#allocation17], 32
    $region93: #{tpu_custom_call.1} parent=1 // pred_fallthru
      _
    %594 = vsyncpa [#allocation4], 1
    %595 = vsyncpa [#allocation7], 1
    %596 = vsyncpa [#allocation10], 1
    %597 = vsyncpa [#allocation13], 1
    %598 = vsyncpa [#allocation5], 1
    %599 = vsyncpa [#allocation17], 1

</llo_original>
